<compile_context>
chip_gen: v7x
topology: tpu7x:2x2x1
jax: 0.10.0
libtpu: 0.0.40
codegen_flags: <defaults>
</compile_context>

<pallas_src>
import jax
import jax.numpy as jnp
from jax import lax
from jax.experimental import pallas as pl
from jax.experimental.pallas import tpu as pltpu


def _downsample1d_kernel(xg_ref, bnd_ref, w12_ref, w0_ref, b_ref, o_ref):
    # xg_ref : (2C, TL)  rows [0:C]  = even taps x[2l]   (conv tap k=1)
    #                    rows [C:2C] = odd  taps x[2l+1] (conv tap k=2)
    # bnd_ref: (C, GL)   column j = x[2*j*TL - 1] (zeros for j == 0): left-halo odd sample
    # w12_ref: (C, 2C)   [ W[:, :, 1] | W[:, :, 2] ]
    # w0_ref : (C, C)    W[:, :, 0]
    # b_ref  : (C, 1)    bias (f32)
    # o_ref  : (C, TL)
    c = w0_ref.shape[0]
    tl = xg_ref.shape[-1]
    gl = bnd_ref.shape[-1]

    x_all = xg_ref[...]                      # (2C, TL)
    x_odd = x_all[c:, :]                     # (C, TL)  == tap k=2 (x[2l+1])

    # Left-halo column for this tile (lane 0 of tap k=0).
    if gl == 1:
        col = bnd_ref[...]                   # (C, 1), zeros (conv left pad)
    else:
        j = pl.program_id(1)
        sel = lax.broadcasted_iota(jnp.int32, (c, gl), 1) == j
        bnd = bnd_ref[...]
        col = jnp.sum(jnp.where(sel, bnd, jnp.zeros_like(bnd)), axis=-1, keepdims=True)

    # tap k=0 : x[2l-1]  == odd slab shifted right by one lane, halo value in lane 0.
    if tl > 1:
        tap0 = jnp.concatenate([col, x_odd[:, : tl - 1]], axis=-1)   # (C, TL)
    else:
        tap0 = col

    acc = jnp.dot(w12_ref[...], x_all, preferred_element_type=jnp.float32)
    acc = acc + jnp.dot(w0_ref[...], tap0, preferred_element_type=jnp.float32)
    o_ref[...] = (acc + b_ref[...]).astype(o_ref.dtype)


def _round_down_128(v):
    return max(128, (int(v) // 128) * 128)


def downsample1d(x, weight, bias, *, tile_l=None, vmem_budget_bytes=32 << 20):
    """Conv1d(dim, dim, kernel=3, stride=2, padding=1). x: (N, C, L) -> (N, C, L_out)."""
    n, c, l = x.shape
    assert weight.shape == (c, c, 3)
    l_out = (l - 1) // 2 + 1                                  # == (l + 2 - 3)//2 + 1

    itemsize = jnp.dtype(x.dtype).itemsize
    w_dtype = x.dtype                                         # bf16 x => bf16 weights (see header)
    w_itemsize = jnp.dtype(w_dtype).itemsize
    w_bytes = 2 * (3 * c * c) * w_itemsize                    # double-buffered W_k12 + W_k0

    # ---- choose the L_out lane tile (VMEM- and dtype-aware, not a flat cap) ----
    if tile_l is None:
        stream_budget = max(int(vmem_budget_bytes) - w_bytes, 8 << 20)
        per_lane = 2 * (3 * c) * itemsize                     # (2C in + C out) double-buffered
        cap = _round_down_128(stream_budget // per_lane)
        tile_l = l_out if l_out <= cap else cap
        # v7x has two TensorCores: expose >=4 grid units when the sequence allows (floor 512 lanes).
        while n * pl.cdiv(l_out, tile_l) < 4 and tile_l > 512:
            new_tile = max(512, _round_down_128(pl.cdiv(tile_l, 2)))
            if new_tile >= tile_l:
                break
            tile_l = new_tile
    else:
        tile_l = int(tile_l)
        if tile_l < l_out:
            tile_l = _round_down_128(tile_l)                  # lane tiles must be 128-multiples
        else:
            tile_l = l_out
    grid_l = pl.cdiv(l_out, tile_l)

    # ---- wrapper relayout: one fused pass producing the two tap slabs ----
    x_e = x[:, :, 0::2]                                       # (n, c, l_out): tap k=1, x[2l]
    x_o = x[:, :, 1::2]                                       # (n, c, l//2) : tap k=2, x[2l+1]
    if x_o.shape[2] < l_out:                                  # L odd -> conv right zero-pad
        x_o = jnp.pad(x_o, ((0, 0), (0, 0), (0, l_out - x_o.shape[2])))
    xg = jnp.concatenate([x_e, x_o], axis=1)                  # (n, 2c, l_out)

    # Left-halo odd sample for every (batch, tile): bnd[:, :, j] = x[2*j*tile_l - 1], 0 for j=0.
    if grid_l == 1:
        bnd = jnp.zeros((n, c, 1), x.dtype)
    else:
        cols = x_o[:, :, tile_l - 1 :: tile_l][:, :, : grid_l - 1]          # (n, c, grid_l-1)
        bnd = jnp.concatenate([jnp.zeros((n, c, 1), x.dtype), cols], axis=2)

    # Weights: tap k=1|k=2 fused for the stacked slab, tap k=0 separate (shifted operand).
    w12 = jnp.concatenate([weight[:, :, 1], weight[:, :, 2]], axis=1).astype(w_dtype)  # (c, 2c)
    w0 = weight[:, :, 0].astype(w_dtype)                                               # (c, c)
    b2 = bias.reshape(c, 1).astype(jnp.float32)

    # ---- VMEM limit from the actual footprint (portable across v5e / v6e / v7x) ----
    stream_bytes = 2 * (3 * c) * tile_l * itemsize            # xg + out blocks, double-buffered
    bnd_bytes = 2 * c * grid_l * itemsize
    footprint = stream_bytes + w_bytes + bnd_bytes + 2 * c * 4
    vmem_limit = int(min(max(footprint * 3 // 2 + (4 << 20), 16 << 20), 56 << 20))

    return pl.pallas_call(
        _downsample1d_kernel,
        out_shape=jax.ShapeDtypeStruct((n, c, l_out), x.dtype),
        grid_spec=pltpu.PrefetchScalarGridSpec(
            num_scalar_prefetch=0,
            grid=(n, grid_l),
            in_specs=[
                pl.BlockSpec((pl.Squeezed(), 2 * c, tile_l), lambda i, j: (i, 0, j)),
                pl.BlockSpec((pl.Squeezed(), c, grid_l), lambda i, j: (i, 0, 0)),
                pl.BlockSpec((c, 2 * c), lambda i, j: (0, 0)),
                pl.BlockSpec((c, c), lambda i, j: (0, 0)),
                pl.BlockSpec((c, 1), lambda i, j: (0, 0)),
            ],
            out_specs=pl.BlockSpec((pl.Squeezed(), c, tile_l), lambda i, j: (i, 0, j)),
        ),
        compiler_params=pltpu.CompilerParams(
            dimension_semantics=("parallel", "parallel"),
            vmem_limit_bytes=vmem_limit,
        ),
    )(xg, bnd, w12, w0, b2)


if __name__ == "__main__":
    def _ref_conv(x, weight, bias):
        y = lax.conv_general_dilated(
            x, weight, window_strides=(2,), padding=((1, 1),),
            dimension_numbers=("NCH", "OIH", "NCH"))
        return y + bias.reshape(1, -1, 1)

    down = jax.jit(downsample1d, static_argnames=("tile_l", "vmem_budget_bytes"))

    # Case 1: module-scale setup Conv1d(4, 4, 3, 2, 1), batch=2, length=16.
    dim, batch, length = 4, 2, 16
    kx, kw, kb = jax.random.split(jax.random.PRNGKey(0), 3)
    bound = (1.0 / (dim * 3.0)) ** 0.5          # PyTorch uniform(-sqrt(k), sqrt(k)) init
    weight = jax.random.uniform(kw, (dim, dim, 3), jnp.float32, -bound, bound)
    bias = jax.random.uniform(kb, (dim,), jnp.float32, -bound, bound)
    x = jax.random.normal(kx, (batch, dim, length), jnp.float32)

    y = jax.block_until_ready(down(x, weight, bias))
    y_ref = _ref_conv(x, weight, bias)
    assert y.shape == (batch, dim, (length + 2 - 3) // 2 + 1)
    assert jnp.allclose(y, y_ref, atol=1e-5, rtol=1e-5), "case 1 mismatch vs reference conv"

    # Case 2: odd length + multi-tile L_out (exercises the cross-tile halo / edge masking path).
    dim2, batch2, length2 = 8, 2, 521
    kx2, kw2, kb2 = jax.random.split(jax.random.PRNGKey(1), 3)
    bound2 = (1.0 / (dim2 * 3.0)) ** 0.5
    weight2 = jax.random.uniform(kw2, (dim2, dim2, 3), jnp.float32, -bound2, bound2)
    bias2 = jax.random.uniform(kb2, (dim2,), jnp.float32, -bound2, bound2)
    x2 = jax.random.normal(kx2, (batch2, dim2, length2), jnp.float32)

    y2 = jax.block_until_ready(down(x2, weight2, bias2, tile_l=128))
    y2_ref = _ref_conv(x2, weight2, bias2)
    assert y2.shape == (batch2, dim2, (length2 + 2 - 3) // 2 + 1)
    assert jnp.allclose(y2, y2_ref, atol=1e-5, rtol=1e-5), "case 2 mismatch vs reference conv"

    print("KERNEL_OK")
</pallas_src>

<mosaic_0001>
module attributes {stable_mosaic.version = 11 : i64} {
  func.func @_downsample1d_kernel(%arg0: i32, %arg1: i32, %arg2: memref<1x8x8xf32, #tpu.memory_space<vmem>>, %arg3: memref<1x4x1xf32, #tpu.memory_space<vmem>>, %arg4: memref<4x8xf32, #tpu.memory_space<vmem>>, %arg5: memref<4x4xf32, #tpu.memory_space<vmem>>, %arg6: memref<4x1xf32, #tpu.memory_space<vmem>>, %arg7: memref<1x4x8xf32, #tpu.memory_space<vmem>>) attributes {dimension_semantics = [#tpu.dimension_semantics<parallel>, #tpu.dimension_semantics<parallel>], iteration_bounds = array<i64: 2, 1>, scalar_prefetch = 0 : i64, scratch_operands = 0 : i64, tpu.core_type = #tpu.core_type<tc>, window_params = [{transform_indices = @transform_0, window_bounds = array<i64: 1, 8, 8>}, {transform_indices = @transform_1, window_bounds = array<i64: 1, 4, 1>}, {pipeline_mode = #tpu.pipeline_mode<synchronous>, transform_indices = @transform_2, window_bounds = array<i64: 4, 8>}, {pipeline_mode = #tpu.pipeline_mode<synchronous>, transform_indices = @transform_3, window_bounds = array<i64: 4, 4>}, {pipeline_mode = #tpu.pipeline_mode<synchronous>, transform_indices = @transform_4, window_bounds = array<i64: 4, 1>}, {transform_indices = @transform_5, window_bounds = array<i64: 1, 4, 8>}]} {
    %c0 = arith.constant 0 : index
    %c0_0 = arith.constant 0 : index
    %c0_1 = arith.constant 0 : index
    %0 = vector.load %arg2[%c0, %c0_0, %c0_1] : memref<1x8x8xf32, #tpu.memory_space<vmem>>, vector<1x8x8xf32>
    %1 = vector.shape_cast %0 : vector<1x8x8xf32> to vector<8x8xf32>
    %2 = vector.extract_strided_slice %1 {offsets = [4, 0], sizes = [4, 8], strides = [1, 1]} : vector<8x8xf32> to vector<4x8xf32>
    %c0_2 = arith.constant 0 : index
    %c0_3 = arith.constant 0 : index
    %c0_4 = arith.constant 0 : index
    %3 = vector.load %arg3[%c0_2, %c0_3, %c0_4] : memref<1x4x1xf32, #tpu.memory_space<vmem>>, vector<1x4x1xf32>
    %4 = vector.shape_cast %3 : vector<1x4x1xf32> to vector<4x1xf32>
    %5 = vector.extract_strided_slice %2 {offsets = [0, 0], sizes = [4, 7], strides = [1, 1]} : vector<4x8xf32> to vector<4x7xf32>
    %6 = tpu.concatenate %4, %5 in 1 : vector<4x1xf32>, vector<4x7xf32> -> vector<4x8xf32>
    %c0_5 = arith.constant 0 : index
    %c0_6 = arith.constant 0 : index
    %7 = vector.load %arg4[%c0_5, %c0_6] : memref<4x8xf32, #tpu.memory_space<vmem>>, vector<4x8xf32>
    %cst = arith.constant dense<0.000000e+00> : vector<4x8xf32>
    %8 = tpu.matmul %7, %1, %cst {dimension_numbers = #tpu.dot_dimension_numbers<[1], [0], [0], [1], [0, 0, 1, 1], [], []>} : vector<4x8xf32>, vector<8x8xf32>, vector<4x8xf32> -> vector<4x8xf32>
    %c0_7 = arith.constant 0 : index
    %c0_8 = arith.constant 0 : index
    %9 = vector.load %arg5[%c0_7, %c0_8] : memref<4x4xf32, #tpu.memory_space<vmem>>, vector<4x4xf32>
    %cst_9 = arith.constant dense<0.000000e+00> : vector<4x8xf32>
    %10 = tpu.matmul %9, %6, %cst_9 {dimension_numbers = #tpu.dot_dimension_numbers<[1], [0], [0], [1], [0, 0, 1, 1], [], []>} : vector<4x4xf32>, vector<4x8xf32>, vector<4x8xf32> -> vector<4x8xf32>
    %11 = arith.addf %8, %10 : vector<4x8xf32>
    %c0_10 = arith.constant 0 : index
    %c0_11 = arith.constant 0 : index
    %12 = vector.load %arg6[%c0_10, %c0_11] : memref<4x1xf32, #tpu.memory_space<vmem>>, vector<4x1xf32>
    %13 = vector.broadcast %12 : vector<4x1xf32> to vector<4x8xf32>
    %14 = arith.addf %11, %13 : vector<4x8xf32>
    %c0_12 = arith.constant 0 : index
    %c0_13 = arith.constant 0 : index
    %c0_14 = arith.constant 0 : index
    %15 = vector.load %arg7[%c0_12, %c0_13, %c0_14] : memref<1x4x8xf32, #tpu.memory_space<vmem>>, vector<1x4x8xf32>
    %16 = vector.shape_cast %15 : vector<1x4x8xf32> to vector<4x8xf32>
    %17 = vector.shape_cast %14 : vector<4x8xf32> to vector<1x4x8xf32>
    tpu.vector_store %arg7[%c0_12, %c0_13, %c0_14], %17 {strides = array<i32>} : memref<1x4x8xf32, #tpu.memory_space<vmem>>, vector<1x4x8xf32>,
    return
  }
  func.func @transform_0(%arg0: i32, %arg1: i32) -> (i32, i32, i32) {
    %c0_i32 = arith.constant 0 : i32
    %c0_i32_0 = arith.constant 0 : i32
    return %arg0, %c0_i32, %arg1 : i32, i32, i32
  }
  func.func @transform_1(%arg0: i32, %arg1: i32) -> (i32, i32, i32) {
    %c0_i32 = arith.constant 0 : i32
    %c0_i32_0 = arith.constant 0 : i32
    %c0_i32_1 = arith.constant 0 : i32
    return %arg0, %c0_i32, %c0_i32_0 : i32, i32, i32
  }
  func.func @transform_2(%arg0: i32, %arg1: i32) -> (i32, i32) {
    %c0_i32 = arith.constant 0 : i32
    %c0_i32_0 = arith.constant 0 : i32
    %c0_i32_1 = arith.constant 0 : i32
    return %c0_i32, %c0_i32_0 : i32, i32
  }
  func.func @transform_3(%arg0: i32, %arg1: i32) -> (i32, i32) {
    %c0_i32 = arith.constant 0 : i32
    %c0_i32_0 = arith.constant 0 : i32
    %c0_i32_1 = arith.constant 0 : i32
    return %c0_i32, %c0_i32_0 : i32, i32
  }
  func.func @transform_4(%arg0: i32, %arg1: i32) -> (i32, i32) {
    %c0_i32 = arith.constant 0 : i32
    %c0_i32_0 = arith.constant 0 : i32
    %c0_i32_1 = arith.constant 0 : i32
    return %c0_i32, %c0_i32_0 : i32, i32
  }
  func.func @transform_5(%arg0: i32, %arg1: i32) -> (i32, i32, i32) {
    %c0_i32 = arith.constant 0 : i32
    %c0_i32_0 = arith.constant 0 : i32
    return %arg0, %c0_i32, %arg1 : i32, i32, i32
  }
}

</mosaic_0001>

<llo_original>
// kernel: downsample1d.1
$region0: #{downsample1d.1}
  #allocation0 [shape = 'u32[]', space=smem, size = 0x4, offset = 0x4, fixed_abs, tag = 'smem constant byte address 0x4 - core index']
  #allocation1 [shape = 'u32[144,128]{1,0:T(1,128)}', space=vmem, size = 0x12000, scoped, tag = 'internal scratch']
  %s0 = inlined_call_operand.vmem [shape: f32[2,8,8], index: 0, kind: input, shape index: {}]
  %s1 = inlined_call_operand.vmem [shape: f32[2,4,1], index: 1, kind: input, shape index: {}]
  %s2 = inlined_call_operand.vmem [shape: f32[4,8], index: 2, kind: input, shape index: {}]
  %s3 = inlined_call_operand.vmem [shape: f32[4,4], index: 3, kind: input, shape index: {}]
  %s4 = inlined_call_operand.vmem [shape: f32[4,1], index: 4, kind: input, shape index: {}]
  %s5 = inlined_call_operand.hbm [shape: f32[2,4,8], index: 5, kind: output, shape index: {}]
  %s6 = sld [smem:[#allocation0]]
  $region53: #{downsample1d.1} parent=0
    _
  %s8 = ssub.s32 1, %s6
  %s9 = scalar_select 0, %s8, %s6
  $region1: #{downsample1d.1} parent=0
    #allocation2 [shape = 'u8[4096]{0}', space=vmem, size = 0x1000, scoped, tag = 'output window, operand 0']
    #allocation3 [shape = 's32[2]{0}', space=sflag, size = 0x8, scoped, tag = 'scoped memory for downsample1d.1']
    %10 = vsyncpa [#allocation3], 0
    %s11 = scalar_lea.sflag [#allocation3], 1
    %12 = vsyncpa %s11, 0
    loop: start=0, step=1, limit=4
    $region2: #{downsample1d.1} parent=1 // loop_pre_header
      _
    $region3: #{downsample1d.1} parent=1 // loop_header
      %s14 = sphi 0, %s18
      %p15 = scmp.ge.s32.totalorder %s14, 4
      %s21 = sphi 0, %s33
      %s22 = sphi 0, %s29
      %s23 = sphi 0, %s21
      %s24 = sphi 0, %s22
      %s25 = sphi 0, %s23
      %s26 = sphi 0, %s24
      %s38 = sphi 0, %s40
      %s41 = sphi 0, %s38
      %s42 = sphi 0, %s41
      %s58 = sphi 0, %s42
      %s64 = sphi 0, %s66
      %s67 = sphi 0, %s64
      %s68 = sphi 0, %s67
      %s84 = sphi 0, %s68
      %s88 = sphi 0, %s88
      %s90 = sphi 0, %s88
      %s91 = sphi 0, %s90
      %s105 = sphi 0, %s91
      %s109 = sphi 0, %s109
      %s111 = sphi 0, %s109
      %s112 = sphi 0, %s111
      %s126 = sphi 0, %s112
      %s130 = sphi 0, %s130
      %s132 = sphi 0, %s130
      %s133 = sphi 0, %s132
      %s147 = sphi 0, %s133
      %s155 = sphi 0, %s157
      %s158 = sphi 0, %s155
      %s159 = sphi 0, %s158
      %s175 = sphi 0, %s159
    $region4: #{downsample1d.1} parent=1 // loop_header_branch
      %17 = sbr.rel (%p15) target = $region8
    $region5: #{downsample1d.1} parent=1 // loop_body
      %s19 = ssub.s32 %s14, 1
      %s20 = ssub.s32 %s14, 2
      %s27 = sadd.s32 1, %s22
      %p28 = scmp.ge.s32.totalorder %s27, 1
      %s29 = scalar_select %p28, 0, %s27
      %s30 = sadd.s32 1, %s21
      %s31 = scalar_select %p28, %s30, %s21
      %p32 = scmp.ge.s32.totalorder %s31, 2
      %s33 = scalar_select %p32, 0, %s31
      %s34 = ssub.s32 %s21, %s33
      %s35 = ssub.s32 %s22, %s29
      %s36 = sor.u32 %s34, %s35
      %p37 = scmp.eq.s32.totalorder %s36, 0
      %s39 = sadd.s32 %s38, 1
      %s40 = scalar_select %p37, %s38, %s39
      %p43 = pneg %p37
      %p44 = scmp.eq.s32.totalorder %s14, 1
      %p45 = por %p43, %p44
      %p46 = scmp.ne.s32.totalorder %s38, %s41
      %p47 = scmp.eq.s32.totalorder %s14, 0
      %p48 = por %p46, %p47
      %p49 = scmp.ne.s32.totalorder %s38, %s41
      %p50 = scmp.eq.s32.totalorder %s19, 1
      %p51 = por %p49, %p50
      %p52 = scmp.ne.s32.totalorder %s41, %s42
      %p53 = scmp.eq.s32.totalorder %s19, 0
      %p54 = por %p52, %p53
      %p55 = scmp.ne.s32.totalorder %s41, %s42
      %p56 = scmp.eq.s32.totalorder %s20, 1
      %p57 = por %p55, %p56
      %p59 = scmp.ne.s32.totalorder %s42, %s58
      %p60 = scmp.eq.s32.totalorder %s20, 0
      %p61 = por %p59, %p60
      %s62 = ssub.s32 %s21, %s33
      %p63 = scmp.eq.s32.totalorder %s62, 0
      %s65 = sadd.s32 %s64, 1
      %s66 = scalar_select %p63, %s64, %s65
      %p69 = pneg %p63
      %p70 = scmp.eq.s32.totalorder %s14, 1
      %p71 = por %p69, %p70
      %p72 = scmp.ne.s32.totalorder %s64, %s67
      %p73 = scmp.eq.s32.totalorder %s14, 0
      %p74 = por %p72, %p73
      %p75 = scmp.ne.s32.totalorder %s64, %s67
      %p76 = scmp.eq.s32.totalorder %s19, 1
      %p77 = por %p75, %p76
      %p78 = scmp.ne.s32.totalorder %s67, %s68
      %p79 = scmp.eq.s32.totalorder %s19, 0
      %p80 = por %p78, %p79
      %p81 = scmp.ne.s32.totalorder %s67, %s68
      %p82 = scmp.eq.s32.totalorder %s20, 1
      %p83 = por %p81, %p82
      %p85 = scmp.ne.s32.totalorder %s68, %s84
      %p86 = scmp.eq.s32.totalorder %s20, 0
      %p87 = por %p85, %p86
      %s89 = sadd.s32 %s88, 1
      %p92 = scmp.eq.s32.totalorder %s14, 1
      %p93 = scmp.ne.s32.totalorder %s88, %s90
      %p94 = scmp.eq.s32.totalorder %s14, 0
      %p95 = por %p93, %p94
      %p96 = scmp.ne.s32.totalorder %s88, %s90
      %p97 = scmp.eq.s32.totalorder %s19, 1
      %p98 = por %p96, %p97
      %p99 = scmp.ne.s32.totalorder %s90, %s91
      %p100 = scmp.eq.s32.totalorder %s19, 0
      %p101 = por %p99, %p100
      %p102 = scmp.ne.s32.totalorder %s90, %s91
      %p103 = scmp.eq.s32.totalorder %s20, 1
      %p104 = por %p102, %p103
      %p106 = scmp.ne.s32.totalorder %s91, %s105
      %p107 = scmp.eq.s32.totalorder %s20, 0
      %p108 = por %p106, %p107
      %s110 = sadd.s32 %s109, 1
      %p113 = scmp.eq.s32.totalorder %s14, 1
      %p114 = scmp.ne.s32.totalorder %s109, %s111
      %p115 = scmp.eq.s32.totalorder %s14, 0
      %p116 = por %p114, %p115
      %p117 = scmp.ne.s32.totalorder %s109, %s111
      %p118 = scmp.eq.s32.totalorder %s19, 1
      %p119 = por %p117, %p118
      %p120 = scmp.ne.s32.totalorder %s111, %s112
      %p121 = scmp.eq.s32.totalorder %s19, 0
      %p122 = por %p120, %p121
      %p123 = scmp.ne.s32.totalorder %s111, %s112
      %p124 = scmp.eq.s32.totalorder %s20, 1
      %p125 = por %p123, %p124
      %p127 = scmp.ne.s32.totalorder %s112, %s126
      %p128 = scmp.eq.s32.totalorder %s20, 0
      %p129 = por %p127, %p128
      %s131 = sadd.s32 %s130, 1
      %p134 = scmp.eq.s32.totalorder %s14, 1
      %p135 = scmp.ne.s32.totalorder %s130, %s132
      %p136 = scmp.eq.s32.totalorder %s14, 0
      %p137 = por %p135, %p136
      %p138 = scmp.ne.s32.totalorder %s130, %s132
      %p139 = scmp.eq.s32.totalorder %s19, 1
      %p140 = por %p138, %p139
      %p141 = scmp.ne.s32.totalorder %s132, %s133
      %p142 = scmp.eq.s32.totalorder %s19, 0
      %p143 = por %p141, %p142
      %p144 = scmp.ne.s32.totalorder %s132, %s133
      %p145 = scmp.eq.s32.totalorder %s20, 1
      %p146 = por %p144, %p145
      %p148 = scmp.ne.s32.totalorder %s133, %s147
      %p149 = scmp.eq.s32.totalorder %s20, 0
      %p150 = por %p148, %p149
      %s151 = ssub.s32 %s21, %s33
      %s152 = ssub.s32 %s22, %s29
      %s153 = sor.u32 %s151, %s152
      %p154 = scmp.eq.s32.totalorder %s153, 0
      %s156 = sadd.s32 %s155, 1
      %s157 = scalar_select %p154, %s155, %s156
      %p160 = pneg %p154
      %p161 = scmp.eq.s32.totalorder %s14, 1
      %p162 = por %p160, %p161
      %p163 = scmp.ne.s32.totalorder %s155, %s158
      %p164 = scmp.eq.s32.totalorder %s14, 0
      %p165 = por %p163, %p164
      %p166 = scmp.ne.s32.totalorder %s155, %s158
      %p167 = scmp.eq.s32.totalorder %s19, 1
      %p168 = por %p166, %p167
      %p169 = scmp.ne.s32.totalorder %s158, %s159
      %p170 = scmp.eq.s32.totalorder %s19, 0
      %p171 = por %p169, %p170
      %p172 = scmp.ne.s32.totalorder %s158, %s159
      %p173 = scmp.eq.s32.totalorder %s20, 1
      %p174 = por %p172, %p173
      %p176 = scmp.ne.s32.totalorder %s159, %s175
      %p177 = scmp.eq.s32.totalorder %s20, 0
      %p178 = por %p176, %p177
      %p179 = scmp.le.s32.totalorder 1, %s14
      %p180 = scmp.lt.s32.totalorder %s14, 3
      %p181 = pnand %p179, %p180
      %p182 = pneg %p181
      // Predicated region
      $region9: #{downsample1d.1} parent=5 // pred_check
        _
      $region10: #{downsample1d.1} parent=5 // pred_check_branch
        %184 = sbr.rel (%p181) target = $region12
      $region11: #{downsample1d.1} parent=5 // pred_region
        %s185 = ssub.s32 %s14, 1
        // Predicated region
        $region13: #{downsample1d.1} parent=11 // pred_check
          %p186 = pneg %p101
        $region14: #{downsample1d.1} parent=11 // pred_check_branch
          %188 = sbr.rel (%p186) target = $region16
        $region15: #{downsample1d.1} parent=11 // pred_region
          _
        $region16: #{downsample1d.1} parent=11 // pred_fallthru
          _
        // Predicated region
        $region17: #{downsample1d.1} parent=11 // pred_check
          %p189 = pneg %p122
        $region18: #{downsample1d.1} parent=11 // pred_check_branch
          %191 = sbr.rel (%p189) target = $region20
        $region19: #{downsample1d.1} parent=11 // pred_region
          _
        $region20: #{downsample1d.1} parent=11 // pred_fallthru
          _
        // Predicated region
        $region21: #{downsample1d.1} parent=11 // pred_check
          %p192 = pneg %p143
        $region22: #{downsample1d.1} parent=11 // pred_check_branch
          %194 = sbr.rel (%p192) target = $region24
        $region23: #{downsample1d.1} parent=11 // pred_region
          _
        $region24: #{downsample1d.1} parent=11 // pred_fallthru
          _
      $region12: #{downsample1d.1} parent=5 // pred_fallthru
        _
      %p195 = scmp.lt.s32.totalorder %s14, 2
      // Predicated region
      $region25: #{downsample1d.1} parent=5 // pred_check
        %p196 = pneg %p195
      $region26: #{downsample1d.1} parent=5 // pred_check_branch
        %198 = sbr.rel (%p196) target = $region28
      $region27: #{downsample1d.1} parent=5 // pred_region
        // Predicated region
        $region29: #{downsample1d.1} parent=27 // pred_check
          %p199 = pneg %p48
        $region30: #{downsample1d.1} parent=27 // pred_check_branch
          %201 = sbr.rel (%p199) target = $region32
        $region31: #{downsample1d.1} parent=27 // pred_region
          %p202 = scmp.lt.s32.totalorder %s21, 1
          %s203 = scalar_select %p202, %s21, 1
          %p204 = scmp.lt.s32.totalorder %s22, 0
          %s205 = scalar_select %p204, %s22, 0
          %s206 = sadd.s32 %s205, %s203
          %s207 = smul.addr %s206, 8
          %s208 = scalar_lea.vmem %s0, %s207
        $region32: #{downsample1d.1} parent=27 // pred_fallthru
          _
        // Predicated region
        $region33: #{downsample1d.1} parent=27 // pred_check
          %p209 = pneg %p74
        $region34: #{downsample1d.1} parent=27 // pred_check_branch
          %211 = sbr.rel (%p209) target = $region36
        $region35: #{downsample1d.1} parent=27 // pred_region
          %p212 = scmp.lt.s32.totalorder %s21, 1
          %s213 = scalar_select %p212, %s21, 1
          %s214 = smul.addr %s213, 4
          %s215 = scalar_lea.vmem %s1, %s214
        $region36: #{downsample1d.1} parent=27 // pred_fallthru
          _
      $region28: #{downsample1d.1} parent=5 // pred_fallthru
        _
      %p216 = scmp.le.s32.totalorder 1, %s14
      %p217 = scmp.lt.s32.totalorder %s14, 3
      %p218 = pnand %p216, %p217
      %p219 = pneg %p218
      // Predicated region
      $region37: #{downsample1d.1} parent=5 // pred_check
        _
      $region38: #{downsample1d.1} parent=5 // pred_check_branch
        %221 = sbr.rel (%p218) target = $region40
      $region39: #{downsample1d.1} parent=5 // pred_region
        %s222 = ssub.s32 %s14, 1
        %p223 = scmp.lt.s32.totalorder %s23, 1
        %s224 = scalar_select %p223, %s23, 1
        %p225 = scmp.lt.s32.totalorder %s24, 0
        %s226 = scalar_select %p225, %s24, 0
        %s227 = sadd.s32 %s226, %s224
        %s228 = smul.addr %s227, 8
        %s229 = scalar_lea.vmem %s0, %s228
        %p230 = pneg %p54
        %p231 = pneg %p51
        %p232 = scmp.lt.s32.totalorder %s23, 1
        %s233 = scalar_select %p232, %s23, 1
        %s234 = smul.addr %s233, 4
        %s235 = scalar_lea.vmem %s1, %s234
        %p236 = pneg %p80
        %p237 = pneg %p77
        %p238 = pneg %p101
        %p239 = pneg %p98
        %p240 = pneg %p122
        %p241 = pneg %p119
        %p242 = pneg %p143
        %p243 = pneg %p140
        %p244 = pneg %p171
        %p245 = pneg %p168
        %s246 = sand.u32 %s158, 1
        %s247 = scalar_lea.sflag [#allocation3], %s246
        %s248 = sand.u32 %s158, 1
        %s249 = smul.addr %s248, 4
        %s250 = scalar_lea.vmem [#allocation2], %s249
        %p251 = scmp.lt.s32.totalorder %s23, 1
        %s252 = scalar_select %p251, %s23, 1
        %p253 = scmp.lt.s32.totalorder %s24, 0
        %s254 = scalar_select %p253, %s24, 0
        %s255 = sadd.s32 %s254, %s252
        %s256 = smul.addr %s255, 8
        %s257 = scalar_lea.vmem %s0, %s256
        %p258 = scmp.lt.s32.totalorder %s23, 1
        %s259 = scalar_select %p258, %s23, 1
        %s260 = smul.addr %s259, 4
        %s261 = scalar_lea.vmem %s1, %s260
        %v262 = vld [vmem:[%s257] sm:$0xff]
        %v263 = vld [vmem:[%s261] sm:$0xf]
        %v265 = vrot.slane %v262, 4
        %266 = vrot.lane.b32.xlu0 %v265, 1
        %v267 = vpop.permute.xlu0 %266
        %vm269 = vcmask 7168
        %v270 = vsel %vm269, %v263, %v267
        %v271 = vld [vmem:[%s2] sm:$0xf]
        %v272 = vld [vmem:[%s3] sm:$0xf]
        %vm273 = vcmask 31744
        %v275 = vsel %vm273, %v272, 0
        %vm277 = vcmask 1043456
        %v279 = vsel %vm277, %v270, 0
        %281 = vmatprep.subr.mxu0 0.0
        %282 = vmatpush1.msra.mxu0 %v279
        %283 = vmatprep.subr.mxu0 0.0
        %284 = vmatpush1.msra.mxu0 0.0
        %285 = vmatprep.subr.mxu0 0.0
        %286 = vmatpush1.msra.mxu0 0.0
        %287 = vmatprep.subr.mxu0 0.0
        %288 = vmatpush1.msra.mxu0 0.0
        %289 = vmatprep.subr.mxu0 0.0
        %290 = vmatpush1.msra.mxu0 0.0
        %291 = vmatprep.subr.mxu0 0.0
        %292 = vmatpush1.msra.mxu0 0.0
        %293 = vmatprep.subr.mxu0 0.0
        %294 = vmatpush1.msra.mxu0 0.0
        %295 = vmatprep.subr.mxu0 0.0
        %296 = vmatpush1.msra.mxu0 0.0
        %297 = vmatprep.subr.mxu0 0.0
        %298 = vmatpush1.msra.mxu0 0.0
        %299 = vmatprep.subr.mxu0 0.0
        %300 = vmatpush1.msra.mxu0 0.0
        %301 = vmatprep.subr.mxu0 0.0
        %302 = vmatpush1.msra.mxu0 0.0
        %303 = vmatprep.subr.mxu0 0.0
        %304 = vmatpush1.msra.mxu0 0.0
        %305 = vmatprep.subr.mxu0 0.0
        %306 = vmatpush1.msra.mxu0 0.0
        %307 = vmatprep.subr.mxu0 0.0
        %308 = vmatpush1.msra.mxu0 0.0
        %309 = vmatprep.subr.mxu0 0.0
        %310 = vmatpush1.msra.mxu0 0.0
        %311 = vmatprep.subr.mxu0 0.0
        %312 = vmatpush1.msra.mxu0 0.0
        %313 = vmatprep.subr.mxu0 0.0
        %314 = vmatpush1.msra.mxu0 0.0
        %315 = vmatprep.subr.mxu0 0.0
        %316 = vmatpush1.msra.mxu0 0.0
        %317 = vmatprep.subr.mxu0 0.0
        %318 = vmatpush1.msra.mxu0 0.0
        %319 = vmatprep.subr.mxu0 0.0
        %320 = vmatpush1.msra.mxu0 0.0
        %321 = vmatprep.subr.mxu0 0.0
        %322 = vmatpush1.msra.mxu0 0.0
        %323 = vmatprep.subr.mxu0 0.0
        %324 = vmatpush1.msra.mxu0 0.0
        %325 = vmatprep.subr.mxu0 0.0
        %326 = vmatpush1.msra.mxu0 0.0
        %327 = vmatprep.subr.mxu0 0.0
        %328 = vmatpush1.msra.mxu0 0.0
        %329 = vmatprep.subr.mxu0 0.0
        %330 = vmatpush1.msra.mxu0 0.0
        %331 = vmatprep.subr.mxu0 0.0
        %332 = vmatpush1.msra.mxu0 0.0
        %333 = vmatprep.subr.mxu0 0.0
        %334 = vmatpush1.msra.mxu0 0.0
        %335 = vmatprep.subr.mxu0 0.0
        %336 = vmatpush1.msra.mxu0 0.0
        %337 = vmatprep.subr.mxu0 0.0
        %338 = vmatpush1.msra.mxu0 0.0
        %339 = vmatprep.subr.mxu0 0.0
        %340 = vmatpush1.msra.mxu0 0.0
        %341 = vmatprep.subr.mxu0 0.0
        %342 = vmatpush1.msra.mxu0 0.0
        %343 = vmatprep.subr.mxu0 0.0
        %344 = vmatpush1.msra.mxu0 0.0
        %345 = vmatprep.mubr.f32.mxu0 0.0
        %346 = vmatmul.mubr.f32.gmra.mrb[0].mxu0 %v275
        %v347 = vpop.f32.mrb[0].mxu0
        %v348 = vadd.f32 0.0, %v347
        %v349 = vpop.f32.mrb[0].mxu0
        %350 = vdwg.mxu0
        %vm351 = vcmask 64512
        %v353 = vsel %vm351, %v271, 0
        %355 = vmatprep.subr.mxu0 0.0
        %356 = vmatpush1.msra.mxu0 %v262
        %357 = vmatprep.subr.mxu0 0.0
        %358 = vmatpush1.msra.mxu0 0.0
        %359 = vmatprep.subr.mxu0 0.0
        %360 = vmatpush1.msra.mxu0 0.0
        %361 = vmatprep.subr.mxu0 0.0
        %362 = vmatpush1.msra.mxu0 0.0
        %363 = vmatprep.subr.mxu0 0.0
        %364 = vmatpush1.msra.mxu0 0.0
        %365 = vmatprep.subr.mxu0 0.0
        %366 = vmatpush1.msra.mxu0 0.0
        %367 = vmatprep.subr.mxu0 0.0
        %368 = vmatpush1.msra.mxu0 0.0
        %369 = vmatprep.subr.mxu0 0.0
        %370 = vmatpush1.msra.mxu0 0.0
        %371 = vmatprep.subr.mxu0 0.0
        %372 = vmatpush1.msra.mxu0 0.0
        %373 = vmatprep.subr.mxu0 0.0
        %374 = vmatpush1.msra.mxu0 0.0
        %375 = vmatprep.subr.mxu0 0.0
        %376 = vmatpush1.msra.mxu0 0.0
        %377 = vmatprep.subr.mxu0 0.0
        %378 = vmatpush1.msra.mxu0 0.0
        %379 = vmatprep.subr.mxu0 0.0
        %380 = vmatpush1.msra.mxu0 0.0
        %381 = vmatprep.subr.mxu0 0.0
        %382 = vmatpush1.msra.mxu0 0.0
        %383 = vmatprep.subr.mxu0 0.0
        %384 = vmatpush1.msra.mxu0 0.0
        %385 = vmatprep.subr.mxu0 0.0
        %386 = vmatpush1.msra.mxu0 0.0
        %387 = vmatprep.subr.mxu0 0.0
        %388 = vmatpush1.msra.mxu0 0.0
        %389 = vmatprep.subr.mxu0 0.0
        %390 = vmatpush1.msra.mxu0 0.0
        %391 = vmatprep.subr.mxu0 0.0
        %392 = vmatpush1.msra.mxu0 0.0
        %393 = vmatprep.subr.mxu0 0.0
        %394 = vmatpush1.msra.mxu0 0.0
        %395 = vmatprep.subr.mxu0 0.0
        %396 = vmatpush1.msra.mxu0 0.0
        %397 = vmatprep.subr.mxu0 0.0
        %398 = vmatpush1.msra.mxu0 0.0
        %399 = vmatprep.subr.mxu0 0.0
        %400 = vmatpush1.msra.mxu0 0.0
        %401 = vmatprep.subr.mxu0 0.0
        %402 = vmatpush1.msra.mxu0 0.0
        %403 = vmatprep.subr.mxu0 0.0
        %404 = vmatpush1.msra.mxu0 0.0
        %405 = vmatprep.subr.mxu0 0.0
        %406 = vmatpush1.msra.mxu0 0.0
        %407 = vmatprep.subr.mxu0 0.0
        %408 = vmatpush1.msra.mxu0 0.0
        %409 = vmatprep.subr.mxu0 0.0
        %410 = vmatpush1.msra.mxu0 0.0
        %411 = vmatprep.subr.mxu0 0.0
        %412 = vmatpush1.msra.mxu0 0.0
        %413 = vmatprep.subr.mxu0 0.0
        %414 = vmatpush1.msra.mxu0 0.0
        %415 = vmatprep.subr.mxu0 0.0
        %416 = vmatpush1.msra.mxu0 0.0
        %417 = vmatprep.subr.mxu0 0.0
        %418 = vmatpush1.msra.mxu0 0.0
        %419 = vmatprep.mubr.f32.mxu0 0.0
        %420 = vmatmul.mubr.f32.gmra.mrb[0].mxu0 %v353
        %v421 = vpop.f32.mrb[0].mxu0
        %v422 = vadd.f32 %v348, %v421
        %v423 = vpop.f32.mrb[0].mxu0
        %424 = vdwg.mxu0
        %v425 = vld [vmem:[%s4] sm:$0xf]
        %427 = vset.pattern.permute.xlu0 0
        %428 = vperm.xlu0 %427, %v425
        %v429 = vpop.permute.xlu0 %428
        %v431 = vadd.f32 %v422, %v429
        %vm432 = vcmask 60416
        %433 = vst.msk [vmem:[%s250] sm:$0xf] %vm432, %v431
        %s434 = sand.u32 %s158, 1
        %s435 = scalar_lea.sflag [#allocation3], %s434
        %s436 = sand.u32 %s158, 1
        %s437 = smul.addr %s436, 4
        %s438 = scalar_lea.vmem [#allocation2], %s437
        // Predicated region
        $region41: #{downsample1d.1} parent=39 // pred_check
          %p439 = pneg %p168
        $region42: #{downsample1d.1} parent=39 // pred_check_branch
          %441 = sbr.rel (%p439) target = $region44
        $region43: #{downsample1d.1} parent=39 // pred_region
          %s443 = ssub.s32 64, 64
          %444 = vsyncadd %s435, %s443
          %s445 = sadd.s32 %s24, %s23
          %s446 = smul.addr %s445, 64
          %s447 = scalar_lea.hbm %s5, %s446
          %s449 = sshll.u32 %s438, 4
          %s450 = int_to_ptr.vmem [resolvable:$true] %s449
          %452 = dma.vmem_to_hbm [thread:$0]  %s450, 64, %s447, %s435
        $region44: #{downsample1d.1} parent=39 // pred_fallthru
          _
      $region40: #{downsample1d.1} parent=5 // pred_fallthru
        _
      %p453 = scmp.le.s32.totalorder 2, %s14
      // Predicated region
      $region45: #{downsample1d.1} parent=5 // pred_check
        %p454 = pneg %p453
      $region46: #{downsample1d.1} parent=5 // pred_check_branch
        %456 = sbr.rel (%p454) target = $region48
      $region47: #{downsample1d.1} parent=5 // pred_region
        %s457 = ssub.s32 %s14, 2
        // Predicated region
        $region49: #{downsample1d.1} parent=47 // pred_check
          %p458 = pneg %p174
        $region50: #{downsample1d.1} parent=47 // pred_check_branch
          %460 = sbr.rel (%p458) target = $region52
        $region51: #{downsample1d.1} parent=47 // pred_region
          %s461 = sand.u32 %s159, 1
          %s462 = scalar_lea.sflag [#allocation3], %s461
          %s463 = sand.u32 %s159, 1
          %s464 = smul.addr %s463, 4
          %s465 = scalar_lea.vmem [#allocation2], %s464
          %466 = dma.done %s462, 64
        $region52: #{downsample1d.1} parent=47 // pred_fallthru
          _
      $region48: #{downsample1d.1} parent=5 // pred_fallthru
        _
    $region6: #{downsample1d.1} parent=1 // loop_footer
      %s18 = sadd.s32 1, %s14
    $region7: #{downsample1d.1} parent=1 // loop_footer_branch
      %13 = sbr.rel target = $region3
    $region8: #{downsample1d.1} parent=1 // loop_exit
      _
    %467 = vsyncpa [#allocation3], 1
    %s468 = scalar_lea.sflag [#allocation3], 1
    %469 = vsyncpa %s468, 1

</llo_original>
